<compile_context>
chip_gen: v6e
topology: v6e:2x2x1
jax: 0.10.0
libtpu: 0.0.40
codegen_flags: <defaults>
</compile_context>

<pallas_src>
import jax
import jax.numpy as jnp
from jax.experimental import pallas as pl
from jax.experimental.pallas import tpu as pltpu

_LANES = 128
_DEFAULT_BLOCK_ROWS = 512        # 512*128*4B = 256 KiB per f32 input block


def _td3_stochastic_kernel(mu_ref, eps_ref, std_ref, scale_ref, trans_ref,
                           out_ref):
    """x = tanh(mu + std*eps) * scaling + translation, lane-dense [br,128]."""
    mu = mu_ref[...].astype(jnp.float32)
    eps = eps_ref[...].astype(jnp.float32)
    std = std_ref[...].astype(jnp.float32)        # (1,128) alternating v/w row
    x = mu + std * eps                            # Normal(mu, std).rsample()
    y = jnp.tanh(x)                               # EUP
    out_ref[...] = (y * scale_ref[...].astype(jnp.float32)
                    + trans_ref[...].astype(jnp.float32)).astype(out_ref.dtype)


def _td3_deterministic_kernel(mu_ref, scale_ref, trans_ref, out_ref):
    """Deterministic path: x = tanh(mu) * scaling + translation."""
    y = jnp.tanh(mu_ref[...].astype(jnp.float32))
    out_ref[...] = (y * scale_ref[...].astype(jnp.float32)
                    + trans_ref[...].astype(jnp.float32)).astype(out_ref.dtype)


def update_fixed_std(fixed_std, scaling=0.98, target_std=0.005):
    """Pure-JAX mirror of DiagGaussianTD3.update_fixed_std.

    A clamp of two scalars -- not kernel-worthy, kept outside Pallas."""
    return jnp.maximum(fixed_std * scaling, target_std)


def diag_gaussian_td3_forward(mu, fixed_std, scaling, translation,
                              num_DO_actions, eps=None, deterministic=False,
                              block_rows=_DEFAULT_BLOCK_ROWS):
    """Pallas forward pass of DiagGaussianTD3.

    mu                  : reshapable to (B, num_DO_actions, 2)  (v, w) pairs
    fixed_std           : size-2 array (the (1, 2) nn.Parameter)
    scaling, translation: broadcastable to (B, num_DO_actions, 2)
    eps                 : standard-normal noise, same shape as mu
                          (required unless deterministic=True)
    returns             : (B, num_DO_actions, 2), dtype of mu
    """
    mu3 = jnp.reshape(mu, (-1, num_DO_actions, 2))
    shape3 = mu3.shape
    out_dtype = mu3.dtype
    m = mu3.size                                   # B * num_DO_actions * 2

    # Lane-dense tiling: [rows_pad, 128], block (br, 128), grid over rows.
    block_rows = max(8, (int(block_rows) // 8) * 8)
    rows = pl.cdiv(m, _LANES)
    br = min(block_rows, pl.cdiv(rows, 8) * 8)     # block rows (multiple of 8)
    rows_pad = pl.cdiv(rows, br) * br
    m_pad = rows_pad * _LANES
    grid = (rows_pad // br,)

    slab_spec = pl.BlockSpec((br, _LANES), lambda i: (i, 0))
    row_spec = pl.BlockSpec((1, _LANES), lambda i: (0, 0))

    def channel_row(a):
        # size-2 per-(v,w)-channel constant -> alternating (1, 128) lane row;
        # broadcast over sublanes inside the kernel.
        return jnp.tile(jnp.reshape(a, (2,)).astype(jnp.float32),
                        _LANES // 2).reshape(1, _LANES)

    def full_slab(a):
        flat = jnp.reshape(jnp.broadcast_to(a, shape3), (-1,))
        if m_pad != m:
            flat = jnp.pad(flat, (0, m_pad - m))
        return jnp.reshape(flat, (rows_pad, _LANES))

    def prep(a):
        a = jnp.asarray(a)
        if a.size == 2:          # per-channel (v,w) constant, e.g. fixed_std
            return channel_row(a), row_spec
        return full_slab(a), slab_spec

    mu_s = full_slab(mu3)
    scale_s, scale_spec = prep(scaling)
    trans_s, trans_spec = prep(translation)

    cparams = pltpu.CompilerParams(dimension_semantics=("parallel",))
    out_shape = jax.ShapeDtypeStruct((rows_pad, _LANES), out_dtype)
    out_spec = pl.BlockSpec((br, _LANES), lambda i: (i, 0))

    if deterministic:
        out = pl.pallas_call(
            _td3_deterministic_kernel,
            grid=grid,
            in_specs=[slab_spec, scale_spec, trans_spec],
            out_specs=out_spec,
            out_shape=out_shape,
            compiler_params=cparams,
        )(mu_s, scale_s, trans_s)
    else:
        if eps is None:
            raise ValueError("eps (standard-normal noise) is required when "
                             "deterministic=False")
        eps_s = full_slab(jnp.reshape(eps, shape3))
        std_row = channel_row(fixed_std)
        out = pl.pallas_call(
            _td3_stochastic_kernel,
            grid=grid,
            in_specs=[slab_spec, slab_spec, row_spec, scale_spec, trans_spec],
            out_specs=out_spec,
            out_shape=out_shape,
            compiler_params=cparams,
        )(mu_s, eps_s, std_row, scale_s, trans_s)

    # Undo padding; matches torch's x.view(-1, num_DO_actions, 2).
    return jnp.reshape(jnp.reshape(out, (-1,))[:m], shape3)


def _reference_forward(mu, fixed_std, scaling, translation, num_DO_actions,
                       eps=None, deterministic=False):
    """Pure-JAX reference mirroring the PyTorch forward."""
    mu3 = jnp.reshape(mu, (-1, num_DO_actions, 2))
    if deterministic:
        x = mu3
    else:
        x = mu3 + jnp.reshape(fixed_std, (1, 1, 2)) * jnp.reshape(eps, mu3.shape)
    x = jnp.tanh(x)
    return x * scaling + translation


if __name__ == "__main__":
    key = jax.random.PRNGKey(0)
    k1, k2, k3, k4 = jax.random.split(key, 4)

    # Small demo shapes: batch 8, 4 DO-actions, (v, w) per action.
    B, num_DO_actions = 8, 4
    mu = jax.random.normal(k1, (B, num_DO_actions, 2), jnp.float32)
    eps = jax.random.normal(k2, (B, num_DO_actions, 2), jnp.float32)
    fixed_std = jnp.array([[0.15, 0.15]], jnp.float32)      # the nn.Parameter
    scaling = jnp.array([[[0.25, 1.0]]], jnp.float32)       # [v_max/2, w_max]
    translation = jax.random.uniform(k3, (B, 1, 2), jnp.float32,
                                     minval=-0.3, maxval=0.3)

    x_stoch = diag_gaussian_td3_forward(mu, fixed_std, scaling, translation,
                                        num_DO_actions, eps=eps)
    x_det = diag_gaussian_td3_forward(mu, fixed_std, scaling, translation,
                                      num_DO_actions, deterministic=True)
    jax.block_until_ready((x_stoch, x_det))

    ref_s = _reference_forward(mu, fixed_std, scaling, translation,
                               num_DO_actions, eps=eps)
    ref_d = _reference_forward(mu, fixed_std, scaling, translation,
                               num_DO_actions, deterministic=True)
    assert x_stoch.shape == (B, num_DO_actions, 2)
    assert x_det.shape == (B, num_DO_actions, 2)
    assert jnp.allclose(x_stoch, ref_s, atol=1e-5, rtol=1e-5)
    assert jnp.allclose(x_det, ref_d, atol=1e-5, rtol=1e-5)

    # Exercise the multi-block (grid > 1) + padding path as well.
    B2, A2 = 192, 3                       # 192*3*2 = 1152 elems -> 2 grid steps
    mu2 = jax.random.normal(k4, (B2, A2, 2), jnp.float32)
    eps2 = jax.random.normal(k2, (B2, A2, 2), jnp.float32)
    trans2 = jax.random.uniform(k3, (B2, 1, 2), jnp.float32,
                                minval=-0.3, maxval=0.3)
    x2 = diag_gaussian_td3_forward(mu2, fixed_std, scaling, trans2, A2,
                                   eps=eps2, block_rows=8)
    jax.block_until_ready(x2)
    ref2 = _reference_forward(mu2, fixed_std, scaling, trans2, A2, eps=eps2)
    assert jnp.allclose(x2, ref2, atol=1e-5, rtol=1e-5)

    # TODO(synk): update_fixed_std is a 2-scalar parameter decay; kept as the
    # pure-JAX helper above rather than a Pallas kernel.
    print("KERNEL_OK")
</pallas_src>

<mosaic_0001>
module attributes {stable_mosaic.version = 11 : i64} {
  func.func @_td3_stochastic_kernel(%arg0: i32, %arg1: memref<8x128xf32, #tpu.memory_space<vmem>>, %arg2: memref<8x128xf32, #tpu.memory_space<vmem>>, %arg3: memref<1x128xf32, #tpu.memory_space<vmem>>, %arg4: memref<1x128xf32, #tpu.memory_space<vmem>>, %arg5: memref<8x128xf32, #tpu.memory_space<vmem>>, %arg6: memref<8x128xf32, #tpu.memory_space<vmem>>) attributes {dimension_semantics = [#tpu.dimension_semantics<parallel>], iteration_bounds = array<i64: 1>, scalar_prefetch = 0 : i64, scratch_operands = 0 : i64, tpu.core_type = #tpu.core_type<tc>, window_params = [{transform_indices = @transform_0, window_bounds = array<i64: 8, 128>}, {transform_indices = @transform_1, window_bounds = array<i64: 8, 128>}, {pipeline_mode = #tpu.pipeline_mode<synchronous>, transform_indices = @transform_2, window_bounds = array<i64: 1, 128>}, {pipeline_mode = #tpu.pipeline_mode<synchronous>, transform_indices = @transform_3, window_bounds = array<i64: 1, 128>}, {transform_indices = @transform_4, window_bounds = array<i64: 8, 128>}, {transform_indices = @transform_5, window_bounds = array<i64: 8, 128>}]} {
    %c0 = arith.constant 0 : index
    %c0_0 = arith.constant 0 : index
    %0 = vector.load %arg1[%c0, %c0_0] : memref<8x128xf32, #tpu.memory_space<vmem>>, vector<8x128xf32>
    %c0_1 = arith.constant 0 : index
    %c0_2 = arith.constant 0 : index
    %1 = vector.load %arg2[%c0_1, %c0_2] : memref<8x128xf32, #tpu.memory_space<vmem>>, vector<8x128xf32>
    %c0_3 = arith.constant 0 : index
    %c0_4 = arith.constant 0 : index
    %2 = vector.load %arg3[%c0_3, %c0_4] : memref<1x128xf32, #tpu.memory_space<vmem>>, vector<1x128xf32>
    %3 = vector.broadcast %2 : vector<1x128xf32> to vector<8x128xf32>
    %4 = arith.mulf %3, %1 : vector<8x128xf32>
    %5 = arith.addf %0, %4 : vector<8x128xf32>
    %6 = math.tanh %5 : vector<8x128xf32>
    %c0_5 = arith.constant 0 : index
    %c0_6 = arith.constant 0 : index
    %7 = vector.load %arg4[%c0_5, %c0_6] : memref<1x128xf32, #tpu.memory_space<vmem>>, vector<1x128xf32>
    %8 = vector.broadcast %7 : vector<1x128xf32> to vector<8x128xf32>
    %9 = arith.mulf %6, %8 : vector<8x128xf32>
    %c0_7 = arith.constant 0 : index
    %c0_8 = arith.constant 0 : index
    %10 = vector.load %arg5[%c0_7, %c0_8] : memref<8x128xf32, #tpu.memory_space<vmem>>, vector<8x128xf32>
    %11 = arith.addf %9, %10 : vector<8x128xf32>
    %c0_9 = arith.constant 0 : index
    %c0_10 = arith.constant 0 : index
    %12 = vector.load %arg6[%c0_9, %c0_10] : memref<8x128xf32, #tpu.memory_space<vmem>>, vector<8x128xf32>
    tpu.vector_store %arg6[%c0_9, %c0_10], %11 {strides = array<i32>} : memref<8x128xf32, #tpu.memory_space<vmem>>, vector<8x128xf32>,
    return
  }
  func.func @transform_0(%arg0: i32) -> (i32, i32) {
    %c0_i32 = arith.constant 0 : i32
    %c0_i32_0 = arith.constant 0 : i32
    return %arg0, %c0_i32 : i32, i32
  }
  func.func @transform_1(%arg0: i32) -> (i32, i32) {
    %c0_i32 = arith.constant 0 : i32
    %c0_i32_0 = arith.constant 0 : i32
    return %arg0, %c0_i32 : i32, i32
  }
  func.func @transform_2(%arg0: i32) -> (i32, i32) {
    %c0_i32 = arith.constant 0 : i32
    %c0_i32_0 = arith.constant 0 : i32
    %c0_i32_1 = arith.constant 0 : i32
    return %c0_i32, %c0_i32_0 : i32, i32
  }
  func.func @transform_3(%arg0: i32) -> (i32, i32) {
    %c0_i32 = arith.constant 0 : i32
    %c0_i32_0 = arith.constant 0 : i32
    %c0_i32_1 = arith.constant 0 : i32
    return %c0_i32, %c0_i32_0 : i32, i32
  }
  func.func @transform_4(%arg0: i32) -> (i32, i32) {
    %c0_i32 = arith.constant 0 : i32
    %c0_i32_0 = arith.constant 0 : i32
    return %arg0, %c0_i32 : i32, i32
  }
  func.func @transform_5(%arg0: i32) -> (i32, i32) {
    %c0_i32 = arith.constant 0 : i32
    %c0_i32_0 = arith.constant 0 : i32
    return %arg0, %c0_i32 : i32, i32
  }
}

</mosaic_0001>

<llo_original>
// kernel: tpu_custom_call.1
$region0: #{tpu_custom_call.1}
  #allocation0 [shape = 'u32[]', space=smem, size = 0x4, offset = 0x4, fixed_abs, tag = 'smem constant byte address 0x4 - core index']
  #allocation1 [shape = 'u32[144,128]{1,0:T(1,128)}', space=vmem, size = 0x12000, scoped, tag = 'internal scratch']
  %s0 = inlined_call_operand.hbm [shape: f32[8,128], index: 0, kind: input, shape index: {}]
  %s1 = inlined_call_operand.hbm [shape: f32[8,128], index: 1, kind: input, shape index: {}]
  %s2 = inlined_call_operand.vmem [shape: f32[1,128], index: 2, kind: input, shape index: {}]
  %s3 = inlined_call_operand.vmem [shape: f32[1,128], index: 3, kind: input, shape index: {}]
  %s4 = inlined_call_operand.hbm [shape: f32[8,128], index: 4, kind: input, shape index: {}]
  %s5 = inlined_call_operand.hbm [shape: f32[8,128], index: 5, kind: output, shape index: {}]
  %s6 = sld [smem:[#allocation0]]
  $region42: #{tpu_custom_call.1} parent=0
    _
  %s8 = ssub.s32 1, %s6
  %s9 = scalar_select 0, %s8, %s6
  $region1: #{tpu_custom_call.1} parent=0
    #allocation2 [shape = 'u8[4096]{0}', space=vmem, size = 0x1000, scoped, tag = 'input window, operand 0, single buffered']
    #allocation3 [shape = 's32[1]{0}', space=sflag, size = 0x4, scoped, tag = 'scoped memory for tpu_custom_call.1']
    #allocation4 [shape = 's32[1]{0}', space=sflag, size = 0x4, scoped, tag = 'scoped memory for tpu_custom_call.1']
    #allocation5 [shape = 'u8[4096]{0}', space=vmem, size = 0x1000, scoped, tag = 'input window, operand 1, single buffered']
    #allocation6 [shape = 's32[1]{0}', space=sflag, size = 0x4, scoped, tag = 'scoped memory for tpu_custom_call.1']
    #allocation7 [shape = 'u8[4096]{0}', space=vmem, size = 0x1000, scoped, tag = 'input window, operand 4, single buffered']
    #allocation8 [shape = 'u8[4096]{0}', space=vmem, size = 0x1000, scoped, tag = 'output window, operand 0, single buffered']
    %10 = vsyncpa [#allocation3], 0
    %11 = vsyncpa [#allocation6], 0
    %12 = vsyncpa [#allocation4], 0
    // Predicated region
    $region2: #{tpu_custom_call.1} parent=1 // pred_check
      _
    $region3: #{tpu_custom_call.1} parent=1 // pred_check_branch
      %14 = sbr.rel (0) target = $region5
    $region4: #{tpu_custom_call.1} parent=1 // pred_region
      %s16 = ssub.s32 128, 128
      %17 = vsyncadd [#allocation3], %s16
      %s19 = sshll.u32 [#allocation2], 4
      %s20 = int_to_ptr.vmem [resolvable:$true] %s19
      %22 = dma.hbm_to_vmem [thread:$0]  %s0, 128, %s20, [#allocation3]
    $region5: #{tpu_custom_call.1} parent=1 // pred_fallthru
      _
    // Predicated region
    $region6: #{tpu_custom_call.1} parent=1 // pred_check
      _
    $region7: #{tpu_custom_call.1} parent=1 // pred_check_branch
      %24 = sbr.rel (0) target = $region9
    $region8: #{tpu_custom_call.1} parent=1 // pred_region
      %s26 = ssub.s32 128, 128
      %27 = vsyncadd [#allocation6], %s26
      %s29 = sshll.u32 [#allocation5], 4
      %s30 = int_to_ptr.vmem [resolvable:$true] %s29
      %32 = dma.hbm_to_vmem [thread:$0]  %s1, 128, %s30, [#allocation6]
    $region9: #{tpu_custom_call.1} parent=1 // pred_fallthru
      _
    // Predicated region
    $region10: #{tpu_custom_call.1} parent=1 // pred_check
      _
    $region11: #{tpu_custom_call.1} parent=1 // pred_check_branch
      %34 = sbr.rel (0) target = $region13
    $region12: #{tpu_custom_call.1} parent=1 // pred_region
      _
    $region13: #{tpu_custom_call.1} parent=1 // pred_fallthru
      _
    // Predicated region
    $region14: #{tpu_custom_call.1} parent=1 // pred_check
      _
    $region15: #{tpu_custom_call.1} parent=1 // pred_check_branch
      %36 = sbr.rel (0) target = $region17
    $region16: #{tpu_custom_call.1} parent=1 // pred_region
      _
    $region17: #{tpu_custom_call.1} parent=1 // pred_fallthru
      _
    // Predicated region
    $region18: #{tpu_custom_call.1} parent=1 // pred_check
      _
    $region19: #{tpu_custom_call.1} parent=1 // pred_check_branch
      %38 = sbr.rel (0) target = $region21
    $region20: #{tpu_custom_call.1} parent=1 // pred_region
      %s40 = ssub.s32 128, 128
      %41 = vsyncadd [#allocation6], %s40
      %s43 = sshll.u32 [#allocation7], 4
      %s44 = int_to_ptr.vmem [resolvable:$true] %s43
      %46 = dma.hbm_to_vmem [thread:$0]  %s4, 128, %s44, [#allocation6]
    $region21: #{tpu_custom_call.1} parent=1 // pred_fallthru
      _
    // Predicated region
    $region22: #{tpu_custom_call.1} parent=1 // pred_check
      _
    $region23: #{tpu_custom_call.1} parent=1 // pred_check_branch
      %48 = sbr.rel (0) target = $region25
    $region24: #{tpu_custom_call.1} parent=1 // pred_region
      %49 = dma.done [#allocation3], 128
    $region25: #{tpu_custom_call.1} parent=1 // pred_fallthru
      _
    // Predicated region
    $region26: #{tpu_custom_call.1} parent=1 // pred_check
      _
    $region27: #{tpu_custom_call.1} parent=1 // pred_check_branch
      %51 = sbr.rel (0) target = $region29
    $region28: #{tpu_custom_call.1} parent=1 // pred_region
      %52 = dma.done [#allocation6], 128
    $region29: #{tpu_custom_call.1} parent=1 // pred_fallthru
      _
    // Predicated region
    $region30: #{tpu_custom_call.1} parent=1 // pred_check
      _
    $region31: #{tpu_custom_call.1} parent=1 // pred_check_branch
      %54 = sbr.rel (0) target = $region33
    $region32: #{tpu_custom_call.1} parent=1 // pred_region
      %55 = dma.done [#allocation6], 128
    $region33: #{tpu_custom_call.1} parent=1 // pred_fallthru
      _
    %v56 = vld [vmem:[#allocation2] sm:$0xff]
    %v57 = vld [vmem:[#allocation5] sm:$0xff]
    %v58 = vld [vmem:[%s2] sm:$0x1]
    %v60 = vlaneseq
    %v61 = vshrl.u32 %v60, 7
    %v62 = vsub.s32 0, %v61
    %v63 = vrot.slane %v58, %v62
    %v65 = vmul.f32 %v63, %v57
    %v66 = vadd.f32 %v56, %v65
    %v67 = vtanh.pop %v66
    %v68 = vld [vmem:[%s3] sm:$0x1]
    %v70 = vlaneseq
    %v71 = vshrl.u32 %v70, 7
    %v72 = vsub.s32 0, %v71
    %v73 = vrot.slane %v68, %v72
    %v75 = vmul.f32 %v67, %v73
    %v76 = vld [vmem:[#allocation7] sm:$0xff]
    %v77 = vadd.f32 %v75, %v76
    %78 = vst [vmem:[#allocation8] sm:$0xff] %v77
    // Predicated region
    $region34: #{tpu_custom_call.1} parent=1 // pred_check
      _
    $region35: #{tpu_custom_call.1} parent=1 // pred_check_branch
      %80 = sbr.rel (0) target = $region37
    $region36: #{tpu_custom_call.1} parent=1 // pred_region
      %s82 = ssub.s32 128, 128
      %83 = vsyncadd [#allocation4], %s82
      %s85 = sshll.u32 [#allocation8], 4
      %s86 = int_to_ptr.vmem [resolvable:$true] %s85
      %88 = dma.vmem_to_hbm [thread:$0]  %s86, 128, %s5, [#allocation4]
    $region37: #{tpu_custom_call.1} parent=1 // pred_fallthru
      _
    // Predicated region
    $region38: #{tpu_custom_call.1} parent=1 // pred_check
      _
    $region39: #{tpu_custom_call.1} parent=1 // pred_check_branch
      %90 = sbr.rel (0) target = $region41
    $region40: #{tpu_custom_call.1} parent=1 // pred_region
      %91 = dma.done [#allocation4], 128
    $region41: #{tpu_custom_call.1} parent=1 // pred_fallthru
      _
    %92 = vsyncpa [#allocation3], 1
    %93 = vsyncpa [#allocation6], 1
    %94 = vsyncpa [#allocation4], 1

</llo_original>
